<compile_context>
chip_gen: v5e
topology: v5e:2x2
jax: 0.10.0
libtpu: 0.0.40
codegen_flags: <defaults>
</compile_context>

<pallas_src>
import jax
import jax.numpy as jnp
from jax.experimental import pallas as pl
from jax.experimental.pallas import tpu as pltpu


def _pick_time_chunk(seq_len, batch, emb_dim, itemsize,
                     vmem_budget=4 << 20, max_rows_per_chunk=128):
    """Pick a time-chunk CT (divisor of T) for the flattened (CT*B, E) block.

    Layout legality for the flat output block: CT*B must be a multiple of 8
    (sublane-dense, unmasked stores, contiguous writeback) OR the block spans
    the whole row axis (CT == T). Among legal choices prefer the largest one
    inside the row / VMEM budget (fewer grid steps -> less per-step pipeline
    overhead); otherwise fall back to the smallest legal chunk.
    """
    legal = []
    for ct in range(1, seq_len + 1):
        if seq_len % ct:
            continue
        rows = ct * batch
        if rows % 8 == 0 or ct == seq_len:
            legal.append(ct)
    in_budget = [ct for ct in legal
                 if ct * batch <= max_rows_per_chunk
                 and ct * batch * emb_dim * itemsize <= vmem_budget]
    if in_budget:
        return max(in_budget)
    return min(legal)          # non-empty: ct == seq_len is always legal


def mean_encoder_forward(ids_flat, emb_table, seq_len, batch, *,
                         max_rows_per_chunk=128, vmem_budget=4 << 20):
    """Fused embedding gather + mean-over-time.

    ids_flat:  (T*B,) int32 token ids, flattened row-major from (T, B).
    emb_table: (V, E) float embedding weights (stays in HBM).
    Returns (emb (T,B,E) table-dtype, mean (B,E) float32).
    """
    T, B = seq_len, batch
    V, E = emb_table.shape
    itemsize = jnp.dtype(emb_table.dtype).itemsize
    CT = _pick_time_chunk(T, B, E, itemsize, vmem_budget, max_rows_per_chunk)
    num_chunks = T // CT
    rows_per_chunk = CT * B
    inv_t = 1.0 / float(T)

    def kernel(ids_ref, table_ref, emb_ref, mean_ref, rows_vmem, sems):
        c = pl.program_id(0)
        base = c * rows_per_chunk

        # Overlapped data-dependent row gather: issue all DMAs, then wait.
        # All SMEM id reads happen before any wait.
        copies = []
        for r in range(rows_per_chunk):            # static unroll (small chunk)
            tok = ids_ref[base + r]                # SMEM scalar read
            cp = pltpu.make_async_copy(
                table_ref.at[pl.ds(tok, 1)],       # (1, E) HBM row
                rows_vmem.at[pl.ds(r, 1)],         # (1, E) VMEM slot (static r)
                sems.at[r])
            cp.start()
            copies.append(cp)
        for cp in copies:
            cp.wait()

        rows = rows_vmem[...]                      # (CT*B, E), sublane/lane dense
        emb_ref[...] = rows.astype(emb_ref.dtype)  # contiguous full-vreg store

        @pl.when(c == 0)
        def _():
            mean_ref[...] = jnp.zeros_like(mean_ref)

        # f32 partial sum over the chunk's time steps, accumulated into the
        # resident (B, E) output block.
        partial = jnp.sum(rows.astype(jnp.float32).reshape(CT, B, E), axis=0)
        mean_ref[...] += partial

        @pl.when(c == pl.num_programs(0) - 1)
        def _():
            mean_ref[...] = mean_ref[...] * inv_t

    emb_flat, mean = pl.pallas_call(
        kernel,
        out_shape=(jax.ShapeDtypeStruct((T * B, E), emb_table.dtype),
                   jax.ShapeDtypeStruct((B, E), jnp.float32)),
        grid_spec=pltpu.PrefetchScalarGridSpec(
            num_scalar_prefetch=1,                  # ids -> SMEM
            grid=(num_chunks,),
            in_specs=[pl.BlockSpec(memory_space=pl.ANY)],     # table stays in HBM
            out_specs=[
                pl.BlockSpec((rows_per_chunk, E), lambda c, ids: (c, 0)),
                pl.BlockSpec((B, E), lambda c, ids: (0, 0)),  # resident accumulator
            ],
            scratch_shapes=[
                pltpu.VMEM((rows_per_chunk, E), emb_table.dtype),
                pltpu.SemaphoreType.DMA((rows_per_chunk,)),
            ],
        ),
        compiler_params=pltpu.CompilerParams(
            dimension_semantics=("arbitrary",)),    # mean reduces over chunks
    )(ids_flat, emb_table)

    emb = emb_flat.reshape(T, B, E)                 # major-dim split: free
    return emb, mean


class MeanEncoder:
    """Pallas-backed equivalent of the PyTorch MeanEncoder (trivial no-RNN encoder)."""

    def __init__(self, num_layers, emb_table):
        self.num_layers = num_layers
        self.emb_table = emb_table      # stands in for nn.Embedding.weight: (vocab, emb_dim)

    def _check_args(self, input, lengths=None, hidden=None):
        s_len, n_batch, n_feats = input.shape
        if lengths is not None:
            assert lengths.shape == (n_batch,)

    def forward(self, input, lengths=None, hidden=None):
        """input: (T, B, nfeat) int32 token ids (nfeat == 1).

        Returns ((mean, mean), emb) with mean expanded to (num_layers, B, E),
        exactly like the PyTorch module (lengths is accepted but — like the
        PyTorch MeanEncoder — not used in the mean).
        """
        self._check_args(input, lengths, hidden)
        T, B, _ = input.shape
        # TODO(synk): OpenNMT multi-feature Embeddings (feature merge) not modeled; nfeat=1 lookup.
        ids_flat = input[:, :, 0].astype(jnp.int32).reshape(T * B)   # (t, b) -> t*B + b
        emb, mean = mean_encoder_forward(ids_flat, self.emb_table, T, B)
        # mean.expand(num_layers, batch, emb_dim): pure broadcast, no copy.
        mean_l = jnp.broadcast_to(mean[None], (self.num_layers, B, mean.shape[-1]))
        return (mean_l, mean_l), emb


if __name__ == "__main__":
    key = jax.random.PRNGKey(0)

    # ---- Test 1: module-level forward (single chunk), small shapes. ----
    T, B, NFEAT = 8, 2, 1
    V, E, L = 50, 128, 2          # E lane-dense (multiple of 128)
    k_tab, k_tok, key = jax.random.split(key, 3)
    table = 0.1 * jax.random.normal(k_tab, (V, E), jnp.float32)
    tokens = jax.random.randint(k_tok, (T, B, NFEAT), 0, V, dtype=jnp.int32)

    enc = MeanEncoder(num_layers=L, emb_table=table)
    (hidden_h, hidden_c), emb = enc.forward(tokens)
    jax.block_until_ready(emb)
    jax.block_until_ready(hidden_h)

    emb_ref = table[tokens[:, :, 0]]                      # (T, B, E)
    mean_ref = emb_ref.mean(axis=0)                       # (B, E)
    hidden_ref = jnp.broadcast_to(mean_ref[None], (L, B, E))

    assert emb.shape == (T, B, E)
    assert hidden_h.shape == (L, B, E) and hidden_c.shape == (L, B, E)
    assert jnp.allclose(emb, emb_ref, atol=1e-6, rtol=1e-6)
    assert jnp.allclose(hidden_h, hidden_ref, atol=1e-5, rtol=1e-5)
    assert jnp.allclose(hidden_c, hidden_h, atol=0.0, rtol=0.0)

    # ---- Test 2: multi-chunk path (exercises cross-chunk accumulation). ----
    T2, B2, V2 = 24, 4, 37
    k_tab2, k_tok2 = jax.random.split(key)
    table2 = 0.1 * jax.random.normal(k_tab2, (V2, E), jnp.float32)
    tokens2 = jax.random.randint(k_tok2, (T2, B2), 0, V2, dtype=jnp.int32)
    ids2 = tokens2.reshape(T2 * B2)
    emb2, mean2 = mean_encoder_forward(ids2, table2, T2, B2,
                                       max_rows_per_chunk=32)  # -> 3 chunks
    jax.block_until_ready(emb2)
    emb2_ref = table2[tokens2]
    mean2_ref = emb2_ref.mean(axis=0)
    assert jnp.allclose(emb2, emb2_ref, atol=1e-6, rtol=1e-6)
    assert jnp.allclose(mean2, mean2_ref, atol=1e-5, rtol=1e-5)

    print("KERNEL_OK")
</pallas_src>

<mosaic_0001>
module attributes {stable_mosaic.version = 11 : i64} {
  func.func @kernel(%arg0: i32, %arg1: memref<16xi32, #tpu.memory_space<smem>>, %arg2: memref<50x128xf32, #tpu.memory_space<any>>, %arg3: memref<16x128xf32, #tpu.memory_space<vmem>>, %arg4: memref<2x128xf32, #tpu.memory_space<vmem>>, %arg5: memref<16x128xf32, #tpu.memory_space<vmem>>, %arg6: memref<16x!tpu.dma_semaphore, #tpu.memory_space<semaphore_mem>>) attributes {dimension_semantics = [#tpu.dimension_semantics<arbitrary>], iteration_bounds = array<i64: 1>, scalar_prefetch = 1 : i64, scratch_operands = 2 : i64, tpu.core_type = #tpu.core_type<tc>, window_params = [{}, {transform_indices = @transform_1, window_bounds = array<i64: 16, 128>}, {pipeline_mode = #tpu.pipeline_mode<synchronous>, transform_indices = @transform_2, window_bounds = array<i64: 2, 128>}]} {
    %c16_i32 = arith.constant 16 : i32
    %0 = arith.muli %arg0, %c16_i32 : i32
    %c0_i32 = arith.constant 0 : i32
    %1 = arith.addi %0, %c0_i32 : i32
    %2 = arith.index_cast %1 : i32 to index
    %3 = memref.load %arg1[%2] : memref<16xi32, #tpu.memory_space<smem>>
    %c0_i32_0 = arith.constant 0 : i32
    %c0_i32_1 = arith.constant 0 : i32
    %4 = tpu.memref_slice %arg2[%3, %c0_i32_1] : memref<50x128xf32, #tpu.memory_space<any>> -> memref<1x128xf32, #tpu.memory_space<any>>
    %c0_i32_2 = arith.constant 0 : i32
    %c0_i32_3 = arith.constant 0 : i32
    %5 = tpu.memref_slice %arg5[%c0_i32_2, %c0_i32_3] : memref<16x128xf32, #tpu.memory_space<vmem>> -> memref<1x128xf32, #tpu.memory_space<vmem>>
    %6 = tpu.memref_slice %arg6[%c0_i32_0] : memref<16x!tpu.dma_semaphore, #tpu.memory_space<semaphore_mem>> -> memref<1x!tpu.dma_semaphore, #tpu.memory_space<semaphore_mem>>
    %7 = tpu.memref_squeeze %6 : memref<1x!tpu.dma_semaphore, #tpu.memory_space<semaphore_mem>> -> memref<!tpu.dma_semaphore, #tpu.memory_space<semaphore_mem>>
    tpu.enqueue_dma source(%4 : memref<1x128xf32, #tpu.memory_space<any>>) target(%5 : memref<1x128xf32, #tpu.memory_space<vmem>>) target_semaphore(%7 : memref<!tpu.dma_semaphore, #tpu.memory_space<semaphore_mem>>)
    %c1_i32 = arith.constant 1 : i32
    %8 = arith.addi %0, %c1_i32 : i32
    %9 = arith.index_cast %8 : i32 to index
    %10 = memref.load %arg1[%9] : memref<16xi32, #tpu.memory_space<smem>>
    %c1_i32_4 = arith.constant 1 : i32
    %c0_i32_5 = arith.constant 0 : i32
    %11 = tpu.memref_slice %arg2[%10, %c0_i32_5] : memref<50x128xf32, #tpu.memory_space<any>> -> memref<1x128xf32, #tpu.memory_space<any>>
    %c1_i32_6 = arith.constant 1 : i32
    %c0_i32_7 = arith.constant 0 : i32
    %12 = tpu.memref_slice %arg5[%c1_i32_6, %c0_i32_7] : memref<16x128xf32, #tpu.memory_space<vmem>> -> memref<1x128xf32, #tpu.memory_space<vmem>>
    %13 = tpu.memref_slice %arg6[%c1_i32_4] : memref<16x!tpu.dma_semaphore, #tpu.memory_space<semaphore_mem>> -> memref<1x!tpu.dma_semaphore, #tpu.memory_space<semaphore_mem>>
    %14 = tpu.memref_squeeze %13 : memref<1x!tpu.dma_semaphore, #tpu.memory_space<semaphore_mem>> -> memref<!tpu.dma_semaphore, #tpu.memory_space<semaphore_mem>>
    tpu.enqueue_dma source(%11 : memref<1x128xf32, #tpu.memory_space<any>>) target(%12 : memref<1x128xf32, #tpu.memory_space<vmem>>) target_semaphore(%14 : memref<!tpu.dma_semaphore, #tpu.memory_space<semaphore_mem>>)
    %c2_i32 = arith.constant 2 : i32
    %15 = arith.addi %0, %c2_i32 : i32
    %16 = arith.index_cast %15 : i32 to index
    %17 = memref.load %arg1[%16] : memref<16xi32, #tpu.memory_space<smem>>
    %c2_i32_8 = arith.constant 2 : i32
    %c0_i32_9 = arith.constant 0 : i32
    %18 = tpu.memref_slice %arg2[%17, %c0_i32_9] : memref<50x128xf32, #tpu.memory_space<any>> -> memref<1x128xf32, #tpu.memory_space<any>>
    %c2_i32_10 = arith.constant 2 : i32
    %c0_i32_11 = arith.constant 0 : i32
    %19 = tpu.memref_slice %arg5[%c2_i32_10, %c0_i32_11] : memref<16x128xf32, #tpu.memory_space<vmem>> -> memref<1x128xf32, #tpu.memory_space<vmem>>
    %20 = tpu.memref_slice %arg6[%c2_i32_8] : memref<16x!tpu.dma_semaphore, #tpu.memory_space<semaphore_mem>> -> memref<1x!tpu.dma_semaphore, #tpu.memory_space<semaphore_mem>>
    %21 = tpu.memref_squeeze %20 : memref<1x!tpu.dma_semaphore, #tpu.memory_space<semaphore_mem>> -> memref<!tpu.dma_semaphore, #tpu.memory_space<semaphore_mem>>
    tpu.enqueue_dma source(%18 : memref<1x128xf32, #tpu.memory_space<any>>) target(%19 : memref<1x128xf32, #tpu.memory_space<vmem>>) target_semaphore(%21 : memref<!tpu.dma_semaphore, #tpu.memory_space<semaphore_mem>>)
    %c3_i32 = arith.constant 3 : i32
    %22 = arith.addi %0, %c3_i32 : i32
    %23 = arith.index_cast %22 : i32 to index
    %24 = memref.load %arg1[%23] : memref<16xi32, #tpu.memory_space<smem>>
    %c3_i32_12 = arith.constant 3 : i32
    %c0_i32_13 = arith.constant 0 : i32
    %25 = tpu.memref_slice %arg2[%24, %c0_i32_13] : memref<50x128xf32, #tpu.memory_space<any>> -> memref<1x128xf32, #tpu.memory_space<any>>
    %c3_i32_14 = arith.constant 3 : i32
    %c0_i32_15 = arith.constant 0 : i32
    %26 = tpu.memref_slice %arg5[%c3_i32_14, %c0_i32_15] : memref<16x128xf32, #tpu.memory_space<vmem>> -> memref<1x128xf32, #tpu.memory_space<vmem>>
    %27 = tpu.memref_slice %arg6[%c3_i32_12] : memref<16x!tpu.dma_semaphore, #tpu.memory_space<semaphore_mem>> -> memref<1x!tpu.dma_semaphore, #tpu.memory_space<semaphore_mem>>
    %28 = tpu.memref_squeeze %27 : memref<1x!tpu.dma_semaphore, #tpu.memory_space<semaphore_mem>> -> memref<!tpu.dma_semaphore, #tpu.memory_space<semaphore_mem>>
    tpu.enqueue_dma source(%25 : memref<1x128xf32, #tpu.memory_space<any>>) target(%26 : memref<1x128xf32, #tpu.memory_space<vmem>>) target_semaphore(%28 : memref<!tpu.dma_semaphore, #tpu.memory_space<semaphore_mem>>)
    %c4_i32 = arith.constant 4 : i32
    %29 = arith.addi %0, %c4_i32 : i32
    %30 = arith.index_cast %29 : i32 to index
    %31 = memref.load %arg1[%30] : memref<16xi32, #tpu.memory_space<smem>>
    %c4_i32_16 = arith.constant 4 : i32
    %c0_i32_17 = arith.constant 0 : i32
    %32 = tpu.memref_slice %arg2[%31, %c0_i32_17] : memref<50x128xf32, #tpu.memory_space<any>> -> memref<1x128xf32, #tpu.memory_space<any>>
    %c4_i32_18 = arith.constant 4 : i32
    %c0_i32_19 = arith.constant 0 : i32
    %33 = tpu.memref_slice %arg5[%c4_i32_18, %c0_i32_19] : memref<16x128xf32, #tpu.memory_space<vmem>> -> memref<1x128xf32, #tpu.memory_space<vmem>>
    %34 = tpu.memref_slice %arg6[%c4_i32_16] : memref<16x!tpu.dma_semaphore, #tpu.memory_space<semaphore_mem>> -> memref<1x!tpu.dma_semaphore, #tpu.memory_space<semaphore_mem>>
    %35 = tpu.memref_squeeze %34 : memref<1x!tpu.dma_semaphore, #tpu.memory_space<semaphore_mem>> -> memref<!tpu.dma_semaphore, #tpu.memory_space<semaphore_mem>>
    tpu.enqueue_dma source(%32 : memref<1x128xf32, #tpu.memory_space<any>>) target(%33 : memref<1x128xf32, #tpu.memory_space<vmem>>) target_semaphore(%35 : memref<!tpu.dma_semaphore, #tpu.memory_space<semaphore_mem>>)
    %c5_i32 = arith.constant 5 : i32
    %36 = arith.addi %0, %c5_i32 : i32
    %37 = arith.index_cast %36 : i32 to index
    %38 = memref.load %arg1[%37] : memref<16xi32, #tpu.memory_space<smem>>
    %c5_i32_20 = arith.constant 5 : i32
    %c0_i32_21 = arith.constant 0 : i32
    %39 = tpu.memref_slice %arg2[%38, %c0_i32_21] : memref<50x128xf32, #tpu.memory_space<any>> -> memref<1x128xf32, #tpu.memory_space<any>>
    %c5_i32_22 = arith.constant 5 : i32
    %c0_i32_23 = arith.constant 0 : i32
    %40 = tpu.memref_slice %arg5[%c5_i32_22, %c0_i32_23] : memref<16x128xf32, #tpu.memory_space<vmem>> -> memref<1x128xf32, #tpu.memory_space<vmem>>
    %41 = tpu.memref_slice %arg6[%c5_i32_20] : memref<16x!tpu.dma_semaphore, #tpu.memory_space<semaphore_mem>> -> memref<1x!tpu.dma_semaphore, #tpu.memory_space<semaphore_mem>>
    %42 = tpu.memref_squeeze %41 : memref<1x!tpu.dma_semaphore, #tpu.memory_space<semaphore_mem>> -> memref<!tpu.dma_semaphore, #tpu.memory_space<semaphore_mem>>
    tpu.enqueue_dma source(%39 : memref<1x128xf32, #tpu.memory_space<any>>) target(%40 : memref<1x128xf32, #tpu.memory_space<vmem>>) target_semaphore(%42 : memref<!tpu.dma_semaphore, #tpu.memory_space<semaphore_mem>>)
    %c6_i32 = arith.constant 6 : i32
    %43 = arith.addi %0, %c6_i32 : i32
    %44 = arith.index_cast %43 : i32 to index
    %45 = memref.load %arg1[%44] : memref<16xi32, #tpu.memory_space<smem>>
    %c6_i32_24 = arith.constant 6 : i32
    %c0_i32_25 = arith.constant 0 : i32
    %46 = tpu.memref_slice %arg2[%45, %c0_i32_25] : memref<50x128xf32, #tpu.memory_space<any>> -> memref<1x128xf32, #tpu.memory_space<any>>
    %c6_i32_26 = arith.constant 6 : i32
    %c0_i32_27 = arith.constant 0 : i32
    %47 = tpu.memref_slice %arg5[%c6_i32_26, %c0_i32_27] : memref<16x128xf32, #tpu.memory_space<vmem>> -> memref<1x128xf32, #tpu.memory_space<vmem>>
    %48 = tpu.memref_slice %arg6[%c6_i32_24] : memref<16x!tpu.dma_semaphore, #tpu.memory_space<semaphore_mem>> -> memref<1x!tpu.dma_semaphore, #tpu.memory_space<semaphore_mem>>
    %49 = tpu.memref_squeeze %48 : memref<1x!tpu.dma_semaphore, #tpu.memory_space<semaphore_mem>> -> memref<!tpu.dma_semaphore, #tpu.memory_space<semaphore_mem>>
    tpu.enqueue_dma source(%46 : memref<1x128xf32, #tpu.memory_space<any>>) target(%47 : memref<1x128xf32, #tpu.memory_space<vmem>>) target_semaphore(%49 : memref<!tpu.dma_semaphore, #tpu.memory_space<semaphore_mem>>)
    %c7_i32 = arith.constant 7 : i32
    %50 = arith.addi %0, %c7_i32 : i32
    %51 = arith.index_cast %50 : i32 to index
    %52 = memref.load %arg1[%51] : memref<16xi32, #tpu.memory_space<smem>>
    %c7_i32_28 = arith.constant 7 : i32
    %c0_i32_29 = arith.constant 0 : i32
    %53 = tpu.memref_slice %arg2[%52, %c0_i32_29] : memref<50x128xf32, #tpu.memory_space<any>> -> memref<1x128xf32, #tpu.memory_space<any>>
    %c7_i32_30 = arith.constant 7 : i32
    %c0_i32_31 = arith.constant 0 : i32
    %54 = tpu.memref_slice %arg5[%c7_i32_30, %c0_i32_31] : memref<16x128xf32, #tpu.memory_space<vmem>> -> memref<1x128xf32, #tpu.memory_space<vmem>>
    %55 = tpu.memref_slice %arg6[%c7_i32_28] : memref<16x!tpu.dma_semaphore, #tpu.memory_space<semaphore_mem>> -> memref<1x!tpu.dma_semaphore, #tpu.memory_space<semaphore_mem>>
    %56 = tpu.memref_squeeze %55 : memref<1x!tpu.dma_semaphore, #tpu.memory_space<semaphore_mem>> -> memref<!tpu.dma_semaphore, #tpu.memory_space<semaphore_mem>>
    tpu.enqueue_dma source(%53 : memref<1x128xf32, #tpu.memory_space<any>>) target(%54 : memref<1x128xf32, #tpu.memory_space<vmem>>) target_semaphore(%56 : memref<!tpu.dma_semaphore, #tpu.memory_space<semaphore_mem>>)
    %c8_i32 = arith.constant 8 : i32
    %57 = arith.addi %0, %c8_i32 : i32
    %58 = arith.index_cast %57 : i32 to index
    %59 = memref.load %arg1[%58] : memref<16xi32, #tpu.memory_space<smem>>
    %c8_i32_32 = arith.constant 8 : i32
    %c0_i32_33 = arith.constant 0 : i32
    %60 = tpu.memref_slice %arg2[%59, %c0_i32_33] : memref<50x128xf32, #tpu.memory_space<any>> -> memref<1x128xf32, #tpu.memory_space<any>>
    %c8_i32_34 = arith.constant 8 : i32
    %c0_i32_35 = arith.constant 0 : i32
    %61 = tpu.memref_slice %arg5[%c8_i32_34, %c0_i32_35] : memref<16x128xf32, #tpu.memory_space<vmem>> -> memref<1x128xf32, #tpu.memory_space<vmem>>
    %62 = tpu.memref_slice %arg6[%c8_i32_32] : memref<16x!tpu.dma_semaphore, #tpu.memory_space<semaphore_mem>> -> memref<1x!tpu.dma_semaphore, #tpu.memory_space<semaphore_mem>>
    %63 = tpu.memref_squeeze %62 : memref<1x!tpu.dma_semaphore, #tpu.memory_space<semaphore_mem>> -> memref<!tpu.dma_semaphore, #tpu.memory_space<semaphore_mem>>
    tpu.enqueue_dma source(%60 : memref<1x128xf32, #tpu.memory_space<any>>) target(%61 : memref<1x128xf32, #tpu.memory_space<vmem>>) target_semaphore(%63 : memref<!tpu.dma_semaphore, #tpu.memory_space<semaphore_mem>>)
    %c9_i32 = arith.constant 9 : i32
    %64 = arith.addi %0, %c9_i32 : i32
    %65 = arith.index_cast %64 : i32 to index
    %66 = memref.load %arg1[%65] : memref<16xi32, #tpu.memory_space<smem>>
    %c9_i32_36 = arith.constant 9 : i32
    %c0_i32_37 = arith.constant 0 : i32
    %67 = tpu.memref_slice %arg2[%66, %c0_i32_37] : memref<50x128xf32, #tpu.memory_space<any>> -> memref<1x128xf32, #tpu.memory_space<any>>
    %c9_i32_38 = arith.constant 9 : i32
    %c0_i32_39 = arith.constant 0 : i32
    %68 = tpu.memref_slice %arg5[%c9_i32_38, %c0_i32_39] : memref<16x128xf32, #tpu.memory_space<vmem>> -> memref<1x128xf32, #tpu.memory_space<vmem>>
    %69 = tpu.memref_slice %arg6[%c9_i32_36] : memref<16x!tpu.dma_semaphore, #tpu.memory_space<semaphore_mem>> -> memref<1x!tpu.dma_semaphore, #tpu.memory_space<semaphore_mem>>
    %70 = tpu.memref_squeeze %69 : memref<1x!tpu.dma_semaphore, #tpu.memory_space<semaphore_mem>> -> memref<!tpu.dma_semaphore, #tpu.memory_space<semaphore_mem>>
    tpu.enqueue_dma source(%67 : memref<1x128xf32, #tpu.memory_space<any>>) target(%68 : memref<1x128xf32, #tpu.memory_space<vmem>>) target_semaphore(%70 : memref<!tpu.dma_semaphore, #tpu.memory_space<semaphore_mem>>)
    %c10_i32 = arith.constant 10 : i32
    %71 = arith.addi %0, %c10_i32 : i32
    %72 = arith.index_cast %71 : i32 to index
    %73 = memref.load %arg1[%72] : memref<16xi32, #tpu.memory_space<smem>>
    %c10_i32_40 = arith.constant 10 : i32
    %c0_i32_41 = arith.constant 0 : i32
    %74 = tpu.memref_slice %arg2[%73, %c0_i32_41] : memref<50x128xf32, #tpu.memory_space<any>> -> memref<1x128xf32, #tpu.memory_space<any>>
    %c10_i32_42 = arith.constant 10 : i32
    %c0_i32_43 = arith.constant 0 : i32
    %75 = tpu.memref_slice %arg5[%c10_i32_42, %c0_i32_43] : memref<16x128xf32, #tpu.memory_space<vmem>> -> memref<1x128xf32, #tpu.memory_space<vmem>>
    %76 = tpu.memref_slice %arg6[%c10_i32_40] : memref<16x!tpu.dma_semaphore, #tpu.memory_space<semaphore_mem>> -> memref<1x!tpu.dma_semaphore, #tpu.memory_space<semaphore_mem>>
    %77 = tpu.memref_squeeze %76 : memref<1x!tpu.dma_semaphore, #tpu.memory_space<semaphore_mem>> -> memref<!tpu.dma_semaphore, #tpu.memory_space<semaphore_mem>>
    tpu.enqueue_dma source(%74 : memref<1x128xf32, #tpu.memory_space<any>>) target(%75 : memref<1x128xf32, #tpu.memory_space<vmem>>) target_semaphore(%77 : memref<!tpu.dma_semaphore, #tpu.memory_space<semaphore_mem>>)
    %c11_i32 = arith.constant 11 : i32
    %78 = arith.addi %0, %c11_i32 : i32
    %79 = arith.index_cast %78 : i32 to index
    %80 = memref.load %arg1[%79] : memref<16xi32, #tpu.memory_space<smem>>
    %c11_i32_44 = arith.constant 11 : i32
    %c0_i32_45 = arith.constant 0 : i32
    %81 = tpu.memref_slice %arg2[%80, %c0_i32_45] : memref<50x128xf32, #tpu.memory_space<any>> -> memref<1x128xf32, #tpu.memory_space<any>>
    %c11_i32_46 = arith.constant 11 : i32
    %c0_i32_47 = arith.constant 0 : i32
    %82 = tpu.memref_slice %arg5[%c11_i32_46, %c0_i32_47] : memref<16x128xf32, #tpu.memory_space<vmem>> -> memref<1x128xf32, #tpu.memory_space<vmem>>
    %83 = tpu.memref_slice %arg6[%c11_i32_44] : memref<16x!tpu.dma_semaphore, #tpu.memory_space<semaphore_mem>> -> memref<1x!tpu.dma_semaphore, #tpu.memory_space<semaphore_mem>>
    %84 = tpu.memref_squeeze %83 : memref<1x!tpu.dma_semaphore, #tpu.memory_space<semaphore_mem>> -> memref<!tpu.dma_semaphore, #tpu.memory_space<semaphore_mem>>
    tpu.enqueue_dma source(%81 : memref<1x128xf32, #tpu.memory_space<any>>) target(%82 : memref<1x128xf32, #tpu.memory_space<vmem>>) target_semaphore(%84 : memref<!tpu.dma_semaphore, #tpu.memory_space<semaphore_mem>>)
    %c12_i32 = arith.constant 12 : i32
    %85 = arith.addi %0, %c12_i32 : i32
    %86 = arith.index_cast %85 : i32 to index
    %87 = memref.load %arg1[%86] : memref<16xi32, #tpu.memory_space<smem>>
    %c12_i32_48 = arith.constant 12 : i32
    %c0_i32_49 = arith.constant 0 : i32
    %88 = tpu.memref_slice %arg2[%87, %c0_i32_49] : memref<50x128xf32, #tpu.memory_space<any>> -> memref<1x128xf32, #tpu.memory_space<any>>
    %c12_i32_50 = arith.constant 12 : i32
    %c0_i32_51 = arith.constant 0 : i32
    %89 = tpu.memref_slice %arg5[%c12_i32_50, %c0_i32_51] : memref<16x128xf32, #tpu.memory_space<vmem>> -> memref<1x128xf32, #tpu.memory_space<vmem>>
    %90 = tpu.memref_slice %arg6[%c12_i32_48] : memref<16x!tpu.dma_semaphore, #tpu.memory_space<semaphore_mem>> -> memref<1x!tpu.dma_semaphore, #tpu.memory_space<semaphore_mem>>
    %91 = tpu.memref_squeeze %90 : memref<1x!tpu.dma_semaphore, #tpu.memory_space<semaphore_mem>> -> memref<!tpu.dma_semaphore, #tpu.memory_space<semaphore_mem>>
    tpu.enqueue_dma source(%88 : memref<1x128xf32, #tpu.memory_space<any>>) target(%89 : memref<1x128xf32, #tpu.memory_space<vmem>>) target_semaphore(%91 : memref<!tpu.dma_semaphore, #tpu.memory_space<semaphore_mem>>)
    %c13_i32 = arith.constant 13 : i32
    %92 = arith.addi %0, %c13_i32 : i32
    %93 = arith.index_cast %92 : i32 to index
    %94 = memref.load %arg1[%93] : memref<16xi32, #tpu.memory_space<smem>>
    %c13_i32_52 = arith.constant 13 : i32
    %c0_i32_53 = arith.constant 0 : i32
    %95 = tpu.memref_slice %arg2[%94, %c0_i32_53] : memref<50x128xf32, #tpu.memory_space<any>> -> memref<1x128xf32, #tpu.memory_space<any>>
    %c13_i32_54 = arith.constant 13 : i32
    %c0_i32_55 = arith.constant 0 : i32
    %96 = tpu.memref_slice %arg5[%c13_i32_54, %c0_i32_55] : memref<16x128xf32, #tpu.memory_space<vmem>> -> memref<1x128xf32, #tpu.memory_space<vmem>>
    %97 = tpu.memref_slice %arg6[%c13_i32_52] : memref<16x!tpu.dma_semaphore, #tpu.memory_space<semaphore_mem>> -> memref<1x!tpu.dma_semaphore, #tpu.memory_space<semaphore_mem>>
    %98 = tpu.memref_squeeze %97 : memref<1x!tpu.dma_semaphore, #tpu.memory_space<semaphore_mem>> -> memref<!tpu.dma_semaphore, #tpu.memory_space<semaphore_mem>>
    tpu.enqueue_dma source(%95 : memref<1x128xf32, #tpu.memory_space<any>>) target(%96 : memref<1x128xf32, #tpu.memory_space<vmem>>) target_semaphore(%98 : memref<!tpu.dma_semaphore, #tpu.memory_space<semaphore_mem>>)
    %c14_i32 = arith.constant 14 : i32
    %99 = arith.addi %0, %c14_i32 : i32
    %100 = arith.index_cast %99 : i32 to index
    %101 = memref.load %arg1[%100] : memref<16xi32, #tpu.memory_space<smem>>
    %c14_i32_56 = arith.constant 14 : i32
    %c0_i32_57 = arith.constant 0 : i32
    %102 = tpu.memref_slice %arg2[%101, %c0_i32_57] : memref<50x128xf32, #tpu.memory_space<any>> -> memref<1x128xf32, #tpu.memory_space<any>>
    %c14_i32_58 = arith.constant 14 : i32
    %c0_i32_59 = arith.constant 0 : i32
    %103 = tpu.memref_slice %arg5[%c14_i32_58, %c0_i32_59] : memref<16x128xf32, #tpu.memory_space<vmem>> -> memref<1x128xf32, #tpu.memory_space<vmem>>
    %104 = tpu.memref_slice %arg6[%c14_i32_56] : memref<16x!tpu.dma_semaphore, #tpu.memory_space<semaphore_mem>> -> memref<1x!tpu.dma_semaphore, #tpu.memory_space<semaphore_mem>>
    %105 = tpu.memref_squeeze %104 : memref<1x!tpu.dma_semaphore, #tpu.memory_space<semaphore_mem>> -> memref<!tpu.dma_semaphore, #tpu.memory_space<semaphore_mem>>
    tpu.enqueue_dma source(%102 : memref<1x128xf32, #tpu.memory_space<any>>) target(%103 : memref<1x128xf32, #tpu.memory_space<vmem>>) target_semaphore(%105 : memref<!tpu.dma_semaphore, #tpu.memory_space<semaphore_mem>>)
    %c15_i32 = arith.constant 15 : i32
    %106 = arith.addi %0, %c15_i32 : i32
    %107 = arith.index_cast %106 : i32 to index
    %108 = memref.load %arg1[%107] : memref<16xi32, #tpu.memory_space<smem>>
    %c15_i32_60 = arith.constant 15 : i32
    %c0_i32_61 = arith.constant 0 : i32
    %109 = tpu.memref_slice %arg2[%108, %c0_i32_61] : memref<50x128xf32, #tpu.memory_space<any>> -> memref<1x128xf32, #tpu.memory_space<any>>
    %c15_i32_62 = arith.constant 15 : i32
    %c0_i32_63 = arith.constant 0 : i32
    %110 = tpu.memref_slice %arg5[%c15_i32_62, %c0_i32_63] : memref<16x128xf32, #tpu.memory_space<vmem>> -> memref<1x128xf32, #tpu.memory_space<vmem>>
    %111 = tpu.memref_slice %arg6[%c15_i32_60] : memref<16x!tpu.dma_semaphore, #tpu.memory_space<semaphore_mem>> -> memref<1x!tpu.dma_semaphore, #tpu.memory_space<semaphore_mem>>
    %112 = tpu.memref_squeeze %111 : memref<1x!tpu.dma_semaphore, #tpu.memory_space<semaphore_mem>> -> memref<!tpu.dma_semaphore, #tpu.memory_space<semaphore_mem>>
    tpu.enqueue_dma source(%109 : memref<1x128xf32, #tpu.memory_space<any>>) target(%110 : memref<1x128xf32, #tpu.memory_space<vmem>>) target_semaphore(%112 : memref<!tpu.dma_semaphore, #tpu.memory_space<semaphore_mem>>)
    %c0_i32_64 = arith.constant 0 : i32
    %c0_i32_65 = arith.constant 0 : i32
    %113 = tpu.memref_slice %arg2[%3, %c0_i32_65] : memref<50x128xf32, #tpu.memory_space<any>> -> memref<1x128xf32, #tpu.memory_space<any>>
    %c0_i32_66 = arith.constant 0 : i32
    %c0_i32_67 = arith.constant 0 : i32
    %114 = tpu.memref_slice %arg5[%c0_i32_66, %c0_i32_67] : memref<16x128xf32, #tpu.memory_space<vmem>> -> memref<1x128xf32, #tpu.memory_space<vmem>>
    %115 = tpu.memref_slice %arg6[%c0_i32_64] : memref<16x!tpu.dma_semaphore, #tpu.memory_space<semaphore_mem>> -> memref<1x!tpu.dma_semaphore, #tpu.memory_space<semaphore_mem>>
    %116 = tpu.memref_squeeze %115 : memref<1x!tpu.dma_semaphore, #tpu.memory_space<semaphore_mem>> -> memref<!tpu.dma_semaphore, #tpu.memory_space<semaphore_mem>>
    tpu.wait_dma2 semaphore(%116 : memref<!tpu.dma_semaphore, #tpu.memory_space<semaphore_mem>>) src(%113 : memref<1x128xf32, #tpu.memory_space<any>>) dst(%114 : memref<1x128xf32, #tpu.memory_space<vmem>>)
    %c1_i32_68 = arith.constant 1 : i32
    %c0_i32_69 = arith.constant 0 : i32
    %117 = tpu.memref_slice %arg2[%10, %c0_i32_69] : memref<50x128xf32, #tpu.memory_space<any>> -> memref<1x128xf32, #tpu.memory_space<any>>
    %c1_i32_70 = arith.constant 1 : i32
    %c0_i32_71 = arith.constant 0 : i32
    %118 = tpu.memref_slice %arg5[%c1_i32_70, %c0_i32_71] : memref<16x128xf32, #tpu.memory_space<vmem>> -> memref<1x128xf32, #tpu.memory_space<vmem>>
    %119 = tpu.memref_slice %arg6[%c1_i32_68] : memref<16x!tpu.dma_semaphore, #tpu.memory_space<semaphore_mem>> -> memref<1x!tpu.dma_semaphore, #tpu.memory_space<semaphore_mem>>
    %120 = tpu.memref_squeeze %119 : memref<1x!tpu.dma_semaphore, #tpu.memory_space<semaphore_mem>> -> memref<!tpu.dma_semaphore, #tpu.memory_space<semaphore_mem>>
    tpu.wait_dma2 semaphore(%120 : memref<!tpu.dma_semaphore, #tpu.memory_space<semaphore_mem>>) src(%117 : memref<1x128xf32, #tpu.memory_space<any>>) dst(%118 : memref<1x128xf32, #tpu.memory_space<vmem>>)
    %c2_i32_72 = arith.constant 2 : i32
    %c0_i32_73 = arith.constant 0 : i32
    %121 = tpu.memref_slice %arg2[%17, %c0_i32_73] : memref<50x128xf32, #tpu.memory_space<any>> -> memref<1x128xf32, #tpu.memory_space<any>>
    %c2_i32_74 = arith.constant 2 : i32
    %c0_i32_75 = arith.constant 0 : i32
    %122 = tpu.memref_slice %arg5[%c2_i32_74, %c0_i32_75] : memref<16x128xf32, #tpu.memory_space<vmem>> -> memref<1x128xf32, #tpu.memory_space<vmem>>
    %123 = tpu.memref_slice %arg6[%c2_i32_72] : memref<16x!tpu.dma_semaphore, #tpu.memory_space<semaphore_mem>> -> memref<1x!tpu.dma_semaphore, #tpu.memory_space<semaphore_mem>>
    %124 = tpu.memref_squeeze %123 : memref<1x!tpu.dma_semaphore, #tpu.memory_space<semaphore_mem>> -> memref<!tpu.dma_semaphore, #tpu.memory_space<semaphore_mem>>
    tpu.wait_dma2 semaphore(%124 : memref<!tpu.dma_semaphore, #tpu.memory_space<semaphore_mem>>) src(%121 : memref<1x128xf32, #tpu.memory_space<any>>) dst(%122 : memref<1x128xf32, #tpu.memory_space<vmem>>)
    %c3_i32_76 = arith.constant 3 : i32
    %c0_i32_77 = arith.constant 0 : i32
    %125 = tpu.memref_slice %arg2[%24, %c0_i32_77] : memref<50x128xf32, #tpu.memory_space<any>> -> memref<1x128xf32, #tpu.memory_space<any>>
    %c3_i32_78 = arith.constant 3 : i32
    %c0_i32_79 = arith.constant 0 : i32
    %126 = tpu.memref_slice %arg5[%c3_i32_78, %c0_i32_79] : memref<16x128xf32, #tpu.memory_space<vmem>> -> memref<1x128xf32, #tpu.memory_space<vmem>>
    %127 = tpu.memref_slice %arg6[%c3_i32_76] : memref<16x!tpu.dma_semaphore, #tpu.memory_space<semaphore_mem>> -> memref<1x!tpu.dma_semaphore, #tpu.memory_space<semaphore_mem>>
    %128 = tpu.memref_squeeze %127 : memref<1x!tpu.dma_semaphore, #tpu.memory_space<semaphore_mem>> -> memref<!tpu.dma_semaphore, #tpu.memory_space<semaphore_mem>>
    tpu.wait_dma2 semaphore(%128 : memref<!tpu.dma_semaphore, #tpu.memory_space<semaphore_mem>>) src(%125 : memref<1x128xf32, #tpu.memory_space<any>>) dst(%126 : memref<1x128xf32, #tpu.memory_space<vmem>>)
    %c4_i32_80 = arith.constant 4 : i32
    %c0_i32_81 = arith.constant 0 : i32
    %129 = tpu.memref_slice %arg2[%31, %c0_i32_81] : memref<50x128xf32, #tpu.memory_space<any>> -> memref<1x128xf32, #tpu.memory_space<any>>
    %c4_i32_82 = arith.constant 4 : i32
    %c0_i32_83 = arith.constant 0 : i32
    %130 = tpu.memref_slice %arg5[%c4_i32_82, %c0_i32_83] : memref<16x128xf32, #tpu.memory_space<vmem>> -> memref<1x128xf32, #tpu.memory_space<vmem>>
    %131 = tpu.memref_slice %arg6[%c4_i32_80] : memref<16x!tpu.dma_semaphore, #tpu.memory_space<semaphore_mem>> -> memref<1x!tpu.dma_semaphore, #tpu.memory_space<semaphore_mem>>
    %132 = tpu.memref_squeeze %131 : memref<1x!tpu.dma_semaphore, #tpu.memory_space<semaphore_mem>> -> memref<!tpu.dma_semaphore, #tpu.memory_space<semaphore_mem>>
    tpu.wait_dma2 semaphore(%132 : memref<!tpu.dma_semaphore, #tpu.memory_space<semaphore_mem>>) src(%129 : memref<1x128xf32, #tpu.memory_space<any>>) dst(%130 : memref<1x128xf32, #tpu.memory_space<vmem>>)
    %c5_i32_84 = arith.constant 5 : i32
    %c0_i32_85 = arith.constant 0 : i32
    %133 = tpu.memref_slice %arg2[%38, %c0_i32_85] : memref<50x128xf32, #tpu.memory_space<any>> -> memref<1x128xf32, #tpu.memory_space<any>>
    %c5_i32_86 = arith.constant 5 : i32
    %c0_i32_87 = arith.constant 0 : i32
    %134 = tpu.memref_slice %arg5[%c5_i32_86, %c0_i32_87] : memref<16x128xf32, #tpu.memory_space<vmem>> -> memref<1x128xf32, #tpu.memory_space<vmem>>
    %135 = tpu.memref_slice %arg6[%c5_i32_84] : memref<16x!tpu.dma_semaphore, #tpu.memory_space<semaphore_mem>> -> memref<1x!tpu.dma_semaphore, #tpu.memory_space<semaphore_mem>>
    %136 = tpu.memref_squeeze %135 : memref<1x!tpu.dma_semaphore, #tpu.memory_space<semaphore_mem>> -> memref<!tpu.dma_semaphore, #tpu.memory_space<semaphore_mem>>
    tpu.wait_dma2 semaphore(%136 : memref<!tpu.dma_semaphore, #tpu.memory_space<semaphore_mem>>) src(%133 : memref<1x128xf32, #tpu.memory_space<any>>) dst(%134 : memref<1x128xf32, #tpu.memory_space<vmem>>)
    %c6_i32_88 = arith.constant 6 : i32
    %c0_i32_89 = arith.constant 0 : i32
    %137 = tpu.memref_slice %arg2[%45, %c0_i32_89] : memref<50x128xf32, #tpu.memory_space<any>> -> memref<1x128xf32, #tpu.memory_space<any>>
    %c6_i32_90 = arith.constant 6 : i32
    %c0_i32_91 = arith.constant 0 : i32
    %138 = tpu.memref_slice %arg5[%c6_i32_90, %c0_i32_91] : memref<16x128xf32, #tpu.memory_space<vmem>> -> memref<1x128xf32, #tpu.memory_space<vmem>>
    %139 = tpu.memref_slice %arg6[%c6_i32_88] : memref<16x!tpu.dma_semaphore, #tpu.memory_space<semaphore_mem>> -> memref<1x!tpu.dma_semaphore, #tpu.memory_space<semaphore_mem>>
    %140 = tpu.memref_squeeze %139 : memref<1x!tpu.dma_semaphore, #tpu.memory_space<semaphore_mem>> -> memref<!tpu.dma_semaphore, #tpu.memory_space<semaphore_mem>>
    tpu.wait_dma2 semaphore(%140 : memref<!tpu.dma_semaphore, #tpu.memory_space<semaphore_mem>>) src(%137 : memref<1x128xf32, #tpu.memory_space<any>>) dst(%138 : memref<1x128xf32, #tpu.memory_space<vmem>>)
    %c7_i32_92 = arith.constant 7 : i32
    %c0_i32_93 = arith.constant 0 : i32
    %141 = tpu.memref_slice %arg2[%52, %c0_i32_93] : memref<50x128xf32, #tpu.memory_space<any>> -> memref<1x128xf32, #tpu.memory_space<any>>
    %c7_i32_94 = arith.constant 7 : i32
    %c0_i32_95 = arith.constant 0 : i32
    %142 = tpu.memref_slice %arg5[%c7_i32_94, %c0_i32_95] : memref<16x128xf32, #tpu.memory_space<vmem>> -> memref<1x128xf32, #tpu.memory_space<vmem>>
    %143 = tpu.memref_slice %arg6[%c7_i32_92] : memref<16x!tpu.dma_semaphore, #tpu.memory_space<semaphore_mem>> -> memref<1x!tpu.dma_semaphore, #tpu.memory_space<semaphore_mem>>
    %144 = tpu.memref_squeeze %143 : memref<1x!tpu.dma_semaphore, #tpu.memory_space<semaphore_mem>> -> memref<!tpu.dma_semaphore, #tpu.memory_space<semaphore_mem>>
    tpu.wait_dma2 semaphore(%144 : memref<!tpu.dma_semaphore, #tpu.memory_space<semaphore_mem>>) src(%141 : memref<1x128xf32, #tpu.memory_space<any>>) dst(%142 : memref<1x128xf32, #tpu.memory_space<vmem>>)
    %c8_i32_96 = arith.constant 8 : i32
    %c0_i32_97 = arith.constant 0 : i32
    %145 = tpu.memref_slice %arg2[%59, %c0_i32_97] : memref<50x128xf32, #tpu.memory_space<any>> -> memref<1x128xf32, #tpu.memory_space<any>>
    %c8_i32_98 = arith.constant 8 : i32
    %c0_i32_99 = arith.constant 0 : i32
    %146 = tpu.memref_slice %arg5[%c8_i32_98, %c0_i32_99] : memref<16x128xf32, #tpu.memory_space<vmem>> -> memref<1x128xf32, #tpu.memory_space<vmem>>
    %147 = tpu.memref_slice %arg6[%c8_i32_96] : memref<16x!tpu.dma_semaphore, #tpu.memory_space<semaphore_mem>> -> memref<1x!tpu.dma_semaphore, #tpu.memory_space<semaphore_mem>>
    %148 = tpu.memref_squeeze %147 : memref<1x!tpu.dma_semaphore, #tpu.memory_space<semaphore_mem>> -> memref<!tpu.dma_semaphore, #tpu.memory_space<semaphore_mem>>
    tpu.wait_dma2 semaphore(%148 : memref<!tpu.dma_semaphore, #tpu.memory_space<semaphore_mem>>) src(%145 : memref<1x128xf32, #tpu.memory_space<any>>) dst(%146 : memref<1x128xf32, #tpu.memory_space<vmem>>)
    %c9_i32_100 = arith.constant 9 : i32
    %c0_i32_101 = arith.constant 0 : i32
    %149 = tpu.memref_slice %arg2[%66, %c0_i32_101] : memref<50x128xf32, #tpu.memory_space<any>> -> memref<1x128xf32, #tpu.memory_space<any>>
    %c9_i32_102 = arith.constant 9 : i32
    %c0_i32_103 = arith.constant 0 : i32
    %150 = tpu.memref_slice %arg5[%c9_i32_102, %c0_i32_103] : memref<16x128xf32, #tpu.memory_space<vmem>> -> memref<1x128xf32, #tpu.memory_space<vmem>>
    %151 = tpu.memref_slice %arg6[%c9_i32_100] : memref<16x!tpu.dma_semaphore, #tpu.memory_space<semaphore_mem>> -> memref<1x!tpu.dma_semaphore, #tpu.memory_space<semaphore_mem>>
    %152 = tpu.memref_squeeze %151 : memref<1x!tpu.dma_semaphore, #tpu.memory_space<semaphore_mem>> -> memref<!tpu.dma_semaphore, #tpu.memory_space<semaphore_mem>>
    tpu.wait_dma2 semaphore(%152 : memref<!tpu.dma_semaphore, #tpu.memory_space<semaphore_mem>>) src(%149 : memref<1x128xf32, #tpu.memory_space<any>>) dst(%150 : memref<1x128xf32, #tpu.memory_space<vmem>>)
    %c10_i32_104 = arith.constant 10 : i32
    %c0_i32_105 = arith.constant 0 : i32
    %153 = tpu.memref_slice %arg2[%73, %c0_i32_105] : memref<50x128xf32, #tpu.memory_space<any>> -> memref<1x128xf32, #tpu.memory_space<any>>
    %c10_i32_106 = arith.constant 10 : i32
    %c0_i32_107 = arith.constant 0 : i32
    %154 = tpu.memref_slice %arg5[%c10_i32_106, %c0_i32_107] : memref<16x128xf32, #tpu.memory_space<vmem>> -> memref<1x128xf32, #tpu.memory_space<vmem>>
    %155 = tpu.memref_slice %arg6[%c10_i32_104] : memref<16x!tpu.dma_semaphore, #tpu.memory_space<semaphore_mem>> -> memref<1x!tpu.dma_semaphore, #tpu.memory_space<semaphore_mem>>
    %156 = tpu.memref_squeeze %155 : memref<1x!tpu.dma_semaphore, #tpu.memory_space<semaphore_mem>> -> memref<!tpu.dma_semaphore, #tpu.memory_space<semaphore_mem>>
    tpu.wait_dma2 semaphore(%156 : memref<!tpu.dma_semaphore, #tpu.memory_space<semaphore_mem>>) src(%153 : memref<1x128xf32, #tpu.memory_space<any>>) dst(%154 : memref<1x128xf32, #tpu.memory_space<vmem>>)
    %c11_i32_108 = arith.constant 11 : i32
    %c0_i32_109 = arith.constant 0 : i32
    %157 = tpu.memref_slice %arg2[%80, %c0_i32_109] : memref<50x128xf32, #tpu.memory_space<any>> -> memref<1x128xf32, #tpu.memory_space<any>>
    %c11_i32_110 = arith.constant 11 : i32
    %c0_i32_111 = arith.constant 0 : i32
    %158 = tpu.memref_slice %arg5[%c11_i32_110, %c0_i32_111] : memref<16x128xf32, #tpu.memory_space<vmem>> -> memref<1x128xf32, #tpu.memory_space<vmem>>
    %159 = tpu.memref_slice %arg6[%c11_i32_108] : memref<16x!tpu.dma_semaphore, #tpu.memory_space<semaphore_mem>> -> memref<1x!tpu.dma_semaphore, #tpu.memory_space<semaphore_mem>>
    %160 = tpu.memref_squeeze %159 : memref<1x!tpu.dma_semaphore, #tpu.memory_space<semaphore_mem>> -> memref<!tpu.dma_semaphore, #tpu.memory_space<semaphore_mem>>
    tpu.wait_dma2 semaphore(%160 : memref<!tpu.dma_semaphore, #tpu.memory_space<semaphore_mem>>) src(%157 : memref<1x128xf32, #tpu.memory_space<any>>) dst(%158 : memref<1x128xf32, #tpu.memory_space<vmem>>)
    %c12_i32_112 = arith.constant 12 : i32
    %c0_i32_113 = arith.constant 0 : i32
    %161 = tpu.memref_slice %arg2[%87, %c0_i32_113] : memref<50x128xf32, #tpu.memory_space<any>> -> memref<1x128xf32, #tpu.memory_space<any>>
    %c12_i32_114 = arith.constant 12 : i32
    %c0_i32_115 = arith.constant 0 : i32
    %162 = tpu.memref_slice %arg5[%c12_i32_114, %c0_i32_115] : memref<16x128xf32, #tpu.memory_space<vmem>> -> memref<1x128xf32, #tpu.memory_space<vmem>>
    %163 = tpu.memref_slice %arg6[%c12_i32_112] : memref<16x!tpu.dma_semaphore, #tpu.memory_space<semaphore_mem>> -> memref<1x!tpu.dma_semaphore, #tpu.memory_space<semaphore_mem>>
    %164 = tpu.memref_squeeze %163 : memref<1x!tpu.dma_semaphore, #tpu.memory_space<semaphore_mem>> -> memref<!tpu.dma_semaphore, #tpu.memory_space<semaphore_mem>>
    tpu.wait_dma2 semaphore(%164 : memref<!tpu.dma_semaphore, #tpu.memory_space<semaphore_mem>>) src(%161 : memref<1x128xf32, #tpu.memory_space<any>>) dst(%162 : memref<1x128xf32, #tpu.memory_space<vmem>>)
    %c13_i32_116 = arith.constant 13 : i32
    %c0_i32_117 = arith.constant 0 : i32
    %165 = tpu.memref_slice %arg2[%94, %c0_i32_117] : memref<50x128xf32, #tpu.memory_space<any>> -> memref<1x128xf32, #tpu.memory_space<any>>
    %c13_i32_118 = arith.constant 13 : i32
    %c0_i32_119 = arith.constant 0 : i32
    %166 = tpu.memref_slice %arg5[%c13_i32_118, %c0_i32_119] : memref<16x128xf32, #tpu.memory_space<vmem>> -> memref<1x128xf32, #tpu.memory_space<vmem>>
    %167 = tpu.memref_slice %arg6[%c13_i32_116] : memref<16x!tpu.dma_semaphore, #tpu.memory_space<semaphore_mem>> -> memref<1x!tpu.dma_semaphore, #tpu.memory_space<semaphore_mem>>
    %168 = tpu.memref_squeeze %167 : memref<1x!tpu.dma_semaphore, #tpu.memory_space<semaphore_mem>> -> memref<!tpu.dma_semaphore, #tpu.memory_space<semaphore_mem>>
    tpu.wait_dma2 semaphore(%168 : memref<!tpu.dma_semaphore, #tpu.memory_space<semaphore_mem>>) src(%165 : memref<1x128xf32, #tpu.memory_space<any>>) dst(%166 : memref<1x128xf32, #tpu.memory_space<vmem>>)
    %c14_i32_120 = arith.constant 14 : i32
    %c0_i32_121 = arith.constant 0 : i32
    %169 = tpu.memref_slice %arg2[%101, %c0_i32_121] : memref<50x128xf32, #tpu.memory_space<any>> -> memref<1x128xf32, #tpu.memory_space<any>>
    %c14_i32_122 = arith.constant 14 : i32
    %c0_i32_123 = arith.constant 0 : i32
    %170 = tpu.memref_slice %arg5[%c14_i32_122, %c0_i32_123] : memref<16x128xf32, #tpu.memory_space<vmem>> -> memref<1x128xf32, #tpu.memory_space<vmem>>
    %171 = tpu.memref_slice %arg6[%c14_i32_120] : memref<16x!tpu.dma_semaphore, #tpu.memory_space<semaphore_mem>> -> memref<1x!tpu.dma_semaphore, #tpu.memory_space<semaphore_mem>>
    %172 = tpu.memref_squeeze %171 : memref<1x!tpu.dma_semaphore, #tpu.memory_space<semaphore_mem>> -> memref<!tpu.dma_semaphore, #tpu.memory_space<semaphore_mem>>
    tpu.wait_dma2 semaphore(%172 : memref<!tpu.dma_semaphore, #tpu.memory_space<semaphore_mem>>) src(%169 : memref<1x128xf32, #tpu.memory_space<any>>) dst(%170 : memref<1x128xf32, #tpu.memory_space<vmem>>)
    %c15_i32_124 = arith.constant 15 : i32
    %c0_i32_125 = arith.constant 0 : i32
    %173 = tpu.memref_slice %arg2[%108, %c0_i32_125] : memref<50x128xf32, #tpu.memory_space<any>> -> memref<1x128xf32, #tpu.memory_space<any>>
    %c15_i32_126 = arith.constant 15 : i32
    %c0_i32_127 = arith.constant 0 : i32
    %174 = tpu.memref_slice %arg5[%c15_i32_126, %c0_i32_127] : memref<16x128xf32, #tpu.memory_space<vmem>> -> memref<1x128xf32, #tpu.memory_space<vmem>>
    %175 = tpu.memref_slice %arg6[%c15_i32_124] : memref<16x!tpu.dma_semaphore, #tpu.memory_space<semaphore_mem>> -> memref<1x!tpu.dma_semaphore, #tpu.memory_space<semaphore_mem>>
    %176 = tpu.memref_squeeze %175 : memref<1x!tpu.dma_semaphore, #tpu.memory_space<semaphore_mem>> -> memref<!tpu.dma_semaphore, #tpu.memory_space<semaphore_mem>>
    tpu.wait_dma2 semaphore(%176 : memref<!tpu.dma_semaphore, #tpu.memory_space<semaphore_mem>>) src(%173 : memref<1x128xf32, #tpu.memory_space<any>>) dst(%174 : memref<1x128xf32, #tpu.memory_space<vmem>>)
    %c0 = arith.constant 0 : index
    %c0_128 = arith.constant 0 : index
    %177 = vector.load %arg5[%c0, %c0_128] : memref<16x128xf32, #tpu.memory_space<vmem>>, vector<16x128xf32>
    %c0_129 = arith.constant 0 : index
    %c0_130 = arith.constant 0 : index
    %178 = vector.load %arg3[%c0_129, %c0_130] : memref<16x128xf32, #tpu.memory_space<vmem>>, vector<16x128xf32>
    tpu.vector_store %arg3[%c0_129, %c0_130], %177 {strides = array<i32>} : memref<16x128xf32, #tpu.memory_space<vmem>>, vector<16x128xf32>,
    %c0_i32_131 = arith.constant 0 : i32
    %179 = arith.cmpi eq, %arg0, %c0_i32_131 : i32
    %180 = arith.extui %179 : i1 to i32
    %c0_i32_132 = arith.constant 0 : i32
    %181 = arith.cmpi ne, %180, %c0_i32_132 : i32
    scf.if %181 {
      %cst_139 = arith.constant 0.000000e+00 : f32
      %190 = vector.broadcast %cst_139 : f32 to vector<2x128xf32>
      %c0_140 = arith.constant 0 : index
      %c0_141 = arith.constant 0 : index
      %191 = vector.load %arg4[%c0_140, %c0_141] : memref<2x128xf32, #tpu.memory_space<vmem>>, vector<2x128xf32>
      tpu.vector_store %arg4[%c0_140, %c0_141], %190 {strides = array<i32>} : memref<2x128xf32, #tpu.memory_space<vmem>>, vector<2x128xf32>,
    } else {
    }
    %182 = vector.shape_cast %177 : vector<16x128xf32> to vector<8x2x128xf32>
    %cst = arith.constant dense<0.000000e+00> : vector<2x128xf32>
    %183 = vector.multi_reduction <add>, %182, %cst [0] : vector<8x2x128xf32> to vector<2x128xf32>
    %c0_133 = arith.constant 0 : index
    %c0_134 = arith.constant 0 : index
    %184 = vector.load %arg4[%c0_133, %c0_134] : memref<2x128xf32, #tpu.memory_space<vmem>>, vector<2x128xf32>
    %185 = arith.addf %184, %183 : vector<2x128xf32>
    %c0_135 = arith.constant 0 : index
    %c0_136 = arith.constant 0 : index
    %186 = vector.load %arg4[%c0_135, %c0_136] : memref<2x128xf32, #tpu.memory_space<vmem>>, vector<2x128xf32>
    tpu.vector_store %arg4[%c0_135, %c0_136], %185 {strides = array<i32>} : memref<2x128xf32, #tpu.memory_space<vmem>>, vector<2x128xf32>,
    %c0_i32_137 = arith.constant 0 : i32
    %187 = arith.cmpi eq, %arg0, %c0_i32_137 : i32
    %188 = arith.extui %187 : i1 to i32
    %c0_i32_138 = arith.constant 0 : i32
    %189 = arith.cmpi ne, %188, %c0_i32_138 : i32
    scf.if %189 {
      %c0_139 = arith.constant 0 : index
      %c0_140 = arith.constant 0 : index
      %190 = vector.load %arg4[%c0_139, %c0_140] : memref<2x128xf32, #tpu.memory_space<vmem>>, vector<2x128xf32>
      %cst_141 = arith.constant 1.250000e-01 : f32
      %191 = vector.broadcast %cst_141 : f32 to vector<2x128xf32>
      %192 = arith.mulf %190, %191 : vector<2x128xf32>
      %c0_142 = arith.constant 0 : index
      %c0_143 = arith.constant 0 : index
      %193 = vector.load %arg4[%c0_142, %c0_143] : memref<2x128xf32, #tpu.memory_space<vmem>>, vector<2x128xf32>
      tpu.vector_store %arg4[%c0_142, %c0_143], %192 {strides = array<i32>} : memref<2x128xf32, #tpu.memory_space<vmem>>, vector<2x128xf32>,
    } else {
    }
    return
  }
  func.func @transform_1(%arg0: i32, %arg1: memref<16xi32, #tpu.memory_space<smem>>) -> (i32, i32) {
    %c0_i32 = arith.constant 0 : i32
    %c0_i32_0 = arith.constant 0 : i32
    return %arg0, %c0_i32 : i32, i32
  }
  func.func @transform_2(%arg0: i32, %arg1: memref<16xi32, #tpu.memory_space<smem>>) -> (i32, i32) {
    %c0_i32 = arith.constant 0 : i32
    %c0_i32_0 = arith.constant 0 : i32
    %c0_i32_1 = arith.constant 0 : i32
    return %c0_i32, %c0_i32_0 : i32, i32
  }
}

</mosaic_0001>

<llo_original>
// kernel: tpu_custom_call.1
$region0: #{tpu_custom_call.1}
  #allocation0 [shape = 'u32[]', space=smem, size = 0x4, offset = 0x4, fixed_abs, tag = 'smem constant byte address 0x4 - core index']
  #allocation1 [shape = 'u32[72,128]{1,0:T(1,128)}', space=vmem, size = 0x9000, scoped, tag = 'internal scratch']
  #allocation2 [shape = 'f32[16,128]{1,0:T(8,128)}', space=vmem, size = 0x2000, scoped, tag = 'scratch operand']
  #allocation3 [shape = 's32[16]{0}', space=sflag, size = 0x40, scoped, tag = 'scratch operand']
  #allocation4 [shape = 's32[1]{0}', space=sflag, size = 0x4, scoped, tag = 'scoped memory for tpu_custom_call.1']
  #allocation5 [shape = 'u8[512]{0}', space=smem, size = 0x200, scoped, tag = 'prefetched SMEM operand 0']
  #allocation10 [shape = 's32[]', space=sflag, size = 0x4, offset = 0, fixed_abs, tag = 'sflag constant byte address 0x0 - dummy sync flag']
  #allocation11 [shape = 's32[]', space=sflag, size = 0x4, offset = 0, fixed_abs, tag = 'sflag constant byte address 0x0 - dummy sync flag']
  #allocation12 [shape = 'u32[]', space=smem, size = 0x4, offset = 0x44, fixed_abs, tag = 'smem constant byte address 0x44 - assertion arg 0']
  #allocation13 [shape = 'u32[]', space=smem, size = 0x4, offset = 0x48, fixed_abs, tag = 'smem constant byte address 0x48 - assertion arg 1']
  #allocation14 [shape = 's32[]', space=sflag, size = 0x4, offset = 0, fixed_abs, tag = 'sflag constant byte address 0x0 - dummy sync flag']
  #allocation15 [shape = 's32[]', space=sflag, size = 0x4, offset = 0, fixed_abs, tag = 'sflag constant byte address 0x0 - dummy sync flag']
  #allocation16 [shape = 's32[]', space=sflag, size = 0x4, offset = 0, fixed_abs, tag = 'sflag constant byte address 0x0 - dummy sync flag']
  #allocation17 [shape = 's32[]', space=sflag, size = 0x4, offset = 0, fixed_abs, tag = 'sflag constant byte address 0x0 - dummy sync flag']
  #allocation18 [shape = 's32[]', space=sflag, size = 0x4, offset = 0, fixed_abs, tag = 'sflag constant byte address 0x0 - dummy sync flag']
  #allocation19 [shape = 's32[]', space=sflag, size = 0x4, offset = 0, fixed_abs, tag = 'sflag constant byte address 0x0 - dummy sync flag']
  #allocation20 [shape = 's32[]', space=sflag, size = 0x4, offset = 0, fixed_abs, tag = 'sflag constant byte address 0x0 - dummy sync flag']
  #allocation21 [shape = 's32[]', space=sflag, size = 0x4, offset = 0, fixed_abs, tag = 'sflag constant byte address 0x0 - dummy sync flag']
  #allocation22 [shape = 's32[]', space=sflag, size = 0x4, offset = 0, fixed_abs, tag = 'sflag constant byte address 0x0 - dummy sync flag']
  #allocation23 [shape = 's32[]', space=sflag, size = 0x4, offset = 0, fixed_abs, tag = 'sflag constant byte address 0x0 - dummy sync flag']
  #allocation24 [shape = 's32[]', space=sflag, size = 0x4, offset = 0, fixed_abs, tag = 'sflag constant byte address 0x0 - dummy sync flag']
  #allocation25 [shape = 's32[]', space=sflag, size = 0x4, offset = 0, fixed_abs, tag = 'sflag constant byte address 0x0 - dummy sync flag']
  #allocation26 [shape = 's32[]', space=sflag, size = 0x4, offset = 0, fixed_abs, tag = 'sflag constant byte address 0x0 - dummy sync flag']
  #allocation27 [shape = 's32[]', space=sflag, size = 0x4, offset = 0, fixed_abs, tag = 'sflag constant byte address 0x0 - dummy sync flag']
  #allocation28 [shape = 's32[]', space=sflag, size = 0x4, offset = 0, fixed_abs, tag = 'sflag constant byte address 0x0 - dummy sync flag']
  #allocation29 [shape = 's32[]', space=sflag, size = 0x4, offset = 0, fixed_abs, tag = 'sflag constant byte address 0x0 - dummy sync flag']
  #allocation30 [shape = 's32[]', space=sflag, size = 0x4, offset = 0, fixed_abs, tag = 'sflag constant byte address 0x0 - dummy sync flag']
  #allocation31 [shape = 's32[]', space=sflag, size = 0x4, offset = 0, fixed_abs, tag = 'sflag constant byte address 0x0 - dummy sync flag']
  #allocation32 [shape = 's32[]', space=sflag, size = 0x4, offset = 0, fixed_abs, tag = 'sflag constant byte address 0x0 - dummy sync flag']
  #allocation33 [shape = 's32[]', space=sflag, size = 0x4, offset = 0, fixed_abs, tag = 'sflag constant byte address 0x0 - dummy sync flag']
  #allocation34 [shape = 's32[]', space=sflag, size = 0x4, offset = 0, fixed_abs, tag = 'sflag constant byte address 0x0 - dummy sync flag']
  #allocation35 [shape = 's32[]', space=sflag, size = 0x4, offset = 0, fixed_abs, tag = 'sflag constant byte address 0x0 - dummy sync flag']
  #allocation36 [shape = 's32[]', space=sflag, size = 0x4, offset = 0, fixed_abs, tag = 'sflag constant byte address 0x0 - dummy sync flag']
  #allocation37 [shape = 's32[]', space=sflag, size = 0x4, offset = 0, fixed_abs, tag = 'sflag constant byte address 0x0 - dummy sync flag']
  #allocation38 [shape = 's32[]', space=sflag, size = 0x4, offset = 0, fixed_abs, tag = 'sflag constant byte address 0x0 - dummy sync flag']
  #allocation39 [shape = 's32[]', space=sflag, size = 0x4, offset = 0, fixed_abs, tag = 'sflag constant byte address 0x0 - dummy sync flag']
  #allocation40 [shape = 's32[]', space=sflag, size = 0x4, offset = 0, fixed_abs, tag = 'sflag constant byte address 0x0 - dummy sync flag']
  #allocation41 [shape = 's32[]', space=sflag, size = 0x4, offset = 0, fixed_abs, tag = 'sflag constant byte address 0x0 - dummy sync flag']
  #allocation42 [shape = 's32[]', space=sflag, size = 0x4, offset = 0, fixed_abs, tag = 'sflag constant byte address 0x0 - dummy sync flag']
  #allocation43 [shape = 's32[]', space=sflag, size = 0x4, offset = 0, fixed_abs, tag = 'sflag constant byte address 0x0 - dummy sync flag']
  %s0 = inlined_call_operand.hbm [shape: s32[16], index: 0, kind: input, shape index: {}]
  %s1 = inlined_call_operand.hbm [shape: f32[50,128], index: 1, kind: input, shape index: {}]
  %s2 = inlined_call_operand.hbm [shape: f32[16,128], index: 2, kind: output, shape index: {0}]
  %s3 = inlined_call_operand.hbm [shape: f32[2,128], index: 3, kind: output, shape index: {1}]
  %4 = xla_tuple %s2, %s3
  %s5 = sld [smem:[#allocation0]]
  $region90: #{tpu_custom_call.1} parent=0
    _
  %s7 = ssub.s32 1, %s5
  %s8 = scalar_select 0, %s7, %s5
  %s10 = sshll.u32 %s0, 4
  %s11 = int_to_ptr.hbm [resolvable:$true] %s10
  %13 = dma.hbm_to_smem %s11, 16, [#allocation5], [#allocation4]
  %15 = dma.done [#allocation4], 16
  %16 = sfence
  $region1: #{tpu_custom_call.1} parent=0
    #allocation6 [shape = 'u8[8192]{0}', space=vmem, size = 0x2000, scoped, tag = 'output window, operand 0, single buffered']
    #allocation7 [shape = 's32[1]{0}', space=sflag, size = 0x4, scoped, tag = 'scoped memory for tpu_custom_call.1']
    #allocation8 [shape = 'u8[1024]{0}', space=vmem, size = 0x400, scoped, tag = 'output window, operand 1, single buffered']
    #allocation9 [shape = 's32[1]{0}', space=sflag, size = 0x4, scoped, tag = 'scoped memory for tpu_custom_call.1']
    %17 = vsyncpa [#allocation7], 0
    %18 = vsyncpa [#allocation9], 0
    %s19 = smul.u32 0, 16
    %s20 = sld [smem:[#allocation5 + %s19]]
    %s21 = scalar_lea.hbm %s1, %s20
    // Predicated region
    $region2: #{tpu_custom_call.1} parent=1 // pred_check
      _
    $region3: #{tpu_custom_call.1} parent=1 // pred_check_branch
      %23 = sbr.rel target = $region5
    $region4: #{tpu_custom_call.1} parent=1 // pred_region
      %24 = sst [smem:[#allocation12]] [#allocation11]
      %25 = sst [smem:[#allocation13]] [#allocation10]
    $region5: #{tpu_custom_call.1} parent=1 // pred_fallthru
      _
    %27 = shalt.err (0)
    %s29 = sshll.u32 %s21, 4
    %s30 = int_to_ptr.hbm [resolvable:$true] %s29
    %s31 = sshll.u32 [#allocation2], 4
    %s32 = int_to_ptr.vmem [resolvable:$true] %s31
    %34 = dma.hbm_to_vmem [thread:$0]  %s30, 16, %s32, [#allocation3]
    %s35 = sadd.s32 %s19, 1
    %s36 = sld [smem:[#allocation5 + %s35]]
    %s37 = scalar_lea.hbm %s1, %s36
    %s38 = scalar_lea.vmem [#allocation2], 1
    %s39 = scalar_lea.sflag [#allocation3], 1
    // Predicated region
    $region6: #{tpu_custom_call.1} parent=1 // pred_check
      _
    $region7: #{tpu_custom_call.1} parent=1 // pred_check_branch
      %41 = sbr.rel target = $region9
    $region8: #{tpu_custom_call.1} parent=1 // pred_region
      %42 = sst [smem:[#allocation12]] [#allocation15]
      %43 = sst [smem:[#allocation13]] [#allocation14]
    $region9: #{tpu_custom_call.1} parent=1 // pred_fallthru
      _
    %45 = shalt.err (0)
    %s47 = sshll.u32 %s37, 4
    %s48 = int_to_ptr.hbm [resolvable:$true] %s47
    %s49 = sshll.u32 %s38, 4
    %s50 = int_to_ptr.vmem [resolvable:$true] %s49
    %52 = dma.hbm_to_vmem [thread:$0]  %s48, 16, %s50, %s39
    %s53 = sadd.s32 %s19, 2
    %s54 = sld [smem:[#allocation5 + %s53]]
    %s55 = scalar_lea.hbm %s1, %s54
    %s56 = scalar_lea.vmem [#allocation2], 2
    %s57 = scalar_lea.sflag [#allocation3], 2
    // Predicated region
    $region10: #{tpu_custom_call.1} parent=1 // pred_check
      _
    $region11: #{tpu_custom_call.1} parent=1 // pred_check_branch
      %59 = sbr.rel target = $region13
    $region12: #{tpu_custom_call.1} parent=1 // pred_region
      %60 = sst [smem:[#allocation12]] [#allocation17]
      %61 = sst [smem:[#allocation13]] [#allocation16]
    $region13: #{tpu_custom_call.1} parent=1 // pred_fallthru
      _
    %63 = shalt.err (0)
    %s65 = sshll.u32 %s55, 4
    %s66 = int_to_ptr.hbm [resolvable:$true] %s65
    %s67 = sshll.u32 %s56, 4
    %s68 = int_to_ptr.vmem [resolvable:$true] %s67
    %70 = dma.hbm_to_vmem [thread:$0]  %s66, 16, %s68, %s57
    %s71 = sadd.s32 %s19, 3
    %s72 = sld [smem:[#allocation5 + %s71]]
    %s73 = scalar_lea.hbm %s1, %s72
    %s74 = scalar_lea.vmem [#allocation2], 3
    %s75 = scalar_lea.sflag [#allocation3], 3
    // Predicated region
    $region14: #{tpu_custom_call.1} parent=1 // pred_check
      _
    $region15: #{tpu_custom_call.1} parent=1 // pred_check_branch
      %77 = sbr.rel target = $region17
    $region16: #{tpu_custom_call.1} parent=1 // pred_region
      %78 = sst [smem:[#allocation12]] [#allocation19]
      %79 = sst [smem:[#allocation13]] [#allocation18]
    $region17: #{tpu_custom_call.1} parent=1 // pred_fallthru
      _
    %81 = shalt.err (0)
    %s83 = sshll.u32 %s73, 4
    %s84 = int_to_ptr.hbm [resolvable:$true] %s83
    %s85 = sshll.u32 %s74, 4
    %s86 = int_to_ptr.vmem [resolvable:$true] %s85
    %88 = dma.hbm_to_vmem [thread:$0]  %s84, 16, %s86, %s75
    %s89 = sadd.s32 %s19, 4
    %s90 = sld [smem:[#allocation5 + %s89]]
    %s91 = scalar_lea.hbm %s1, %s90
    %s92 = scalar_lea.vmem [#allocation2], 4
    %s93 = scalar_lea.sflag [#allocation3], 4
    // Predicated region
    $region18: #{tpu_custom_call.1} parent=1 // pred_check
      _
    $region19: #{tpu_custom_call.1} parent=1 // pred_check_branch
      %95 = sbr.rel target = $region21
    $region20: #{tpu_custom_call.1} parent=1 // pred_region
      %96 = sst [smem:[#allocation12]] [#allocation21]
      %97 = sst [smem:[#allocation13]] [#allocation20]
    $region21: #{tpu_custom_call.1} parent=1 // pred_fallthru
      _
    %99 = shalt.err (0)
    %s101 = sshll.u32 %s91, 4
    %s102 = int_to_ptr.hbm [resolvable:$true] %s101
    %s103 = sshll.u32 %s92, 4
    %s104 = int_to_ptr.vmem [resolvable:$true] %s103
    %106 = dma.hbm_to_vmem [thread:$0]  %s102, 16, %s104, %s93
    %s107 = sadd.s32 %s19, 5
    %s108 = sld [smem:[#allocation5 + %s107]]
    %s109 = scalar_lea.hbm %s1, %s108
    %s110 = scalar_lea.vmem [#allocation2], 5
    %s111 = scalar_lea.sflag [#allocation3], 5
    // Predicated region
    $region22: #{tpu_custom_call.1} parent=1 // pred_check
      _
    $region23: #{tpu_custom_call.1} parent=1 // pred_check_branch
      %113 = sbr.rel target = $region25
    $region24: #{tpu_custom_call.1} parent=1 // pred_region
      %114 = sst [smem:[#allocation12]] [#allocation23]
      %115 = sst [smem:[#allocation13]] [#allocation22]
    $region25: #{tpu_custom_call.1} parent=1 // pred_fallthru
      _
    %117 = shalt.err (0)
    %s119 = sshll.u32 %s109, 4
    %s120 = int_to_ptr.hbm [resolvable:$true] %s119
    %s121 = sshll.u32 %s110, 4
    %s122 = int_to_ptr.vmem [resolvable:$true] %s121
    %124 = dma.hbm_to_vmem [thread:$0]  %s120, 16, %s122, %s111
    %s125 = sadd.s32 %s19, 6
    %s126 = sld [smem:[#allocation5 + %s125]]
    %s127 = scalar_lea.hbm %s1, %s126
    %s128 = scalar_lea.vmem [#allocation2], 6
    %s129 = scalar_lea.sflag [#allocation3], 6
    // Predicated region
    $region26: #{tpu_custom_call.1} parent=1 // pred_check
      _
    $region27: #{tpu_custom_call.1} parent=1 // pred_check_branch
      %131 = sbr.rel target = $region29
    $region28: #{tpu_custom_call.1} parent=1 // pred_region
      %132 = sst [smem:[#allocation12]] [#allocation25]
      %133 = sst [smem:[#allocation13]] [#allocation24]
    $region29: #{tpu_custom_call.1} parent=1 // pred_fallthru
      _
    %135 = shalt.err (0)
    %s137 = sshll.u32 %s127, 4
    %s138 = int_to_ptr.hbm [resolvable:$true] %s137
    %s139 = sshll.u32 %s128, 4
    %s140 = int_to_ptr.vmem [resolvable:$true] %s139
    %142 = dma.hbm_to_vmem [thread:$0]  %s138, 16, %s140, %s129
    %s143 = sadd.s32 %s19, 7
    %s144 = sld [smem:[#allocation5 + %s143]]
    %s145 = scalar_lea.hbm %s1, %s144
    %s146 = scalar_lea.vmem [#allocation2], 7
    %s147 = scalar_lea.sflag [#allocation3], 7
    // Predicated region
    $region30: #{tpu_custom_call.1} parent=1 // pred_check
      _
    $region31: #{tpu_custom_call.1} parent=1 // pred_check_branch
      %149 = sbr.rel target = $region33
    $region32: #{tpu_custom_call.1} parent=1 // pred_region
      %150 = sst [smem:[#allocation12]] [#allocation27]
      %151 = sst [smem:[#allocation13]] [#allocation26]
    $region33: #{tpu_custom_call.1} parent=1 // pred_fallthru
      _
    %153 = shalt.err (0)
    %s155 = sshll.u32 %s145, 4
    %s156 = int_to_ptr.hbm [resolvable:$true] %s155
    %s157 = sshll.u32 %s146, 4
    %s158 = int_to_ptr.vmem [resolvable:$true] %s157
    %160 = dma.hbm_to_vmem [thread:$0]  %s156, 16, %s158, %s147
    %s161 = sadd.s32 %s19, 8
    %s162 = sld [smem:[#allocation5 + %s161]]
    %s163 = scalar_lea.hbm %s1, %s162
    %s164 = scalar_lea.vmem [#allocation2], 8
    %s165 = scalar_lea.sflag [#allocation3], 8
    // Predicated region
    $region34: #{tpu_custom_call.1} parent=1 // pred_check
      _
    $region35: #{tpu_custom_call.1} parent=1 // pred_check_branch
      %167 = sbr.rel target = $region37
    $region36: #{tpu_custom_call.1} parent=1 // pred_region
      %168 = sst [smem:[#allocation12]] [#allocation29]
      %169 = sst [smem:[#allocation13]] [#allocation28]
    $region37: #{tpu_custom_call.1} parent=1 // pred_fallthru
      _
    %171 = shalt.err (0)
    %s173 = sshll.u32 %s163, 4
    %s174 = int_to_ptr.hbm [resolvable:$true] %s173
    %s175 = sshll.u32 %s164, 4
    %s176 = int_to_ptr.vmem [resolvable:$true] %s175
    %178 = dma.hbm_to_vmem [thread:$0]  %s174, 16, %s176, %s165
    %s179 = sadd.s32 %s19, 9
    %s180 = sld [smem:[#allocation5 + %s179]]
    %s181 = scalar_lea.hbm %s1, %s180
    %s182 = scalar_lea.vmem [#allocation2], 9
    %s183 = scalar_lea.sflag [#allocation3], 9
    // Predicated region
    $region38: #{tpu_custom_call.1} parent=1 // pred_check
      _
    $region39: #{tpu_custom_call.1} parent=1 // pred_check_branch
      %185 = sbr.rel target = $region41
    $region40: #{tpu_custom_call.1} parent=1 // pred_region
      %186 = sst [smem:[#allocation12]] [#allocation31]
      %187 = sst [smem:[#allocation13]] [#allocation30]
    $region41: #{tpu_custom_call.1} parent=1 // pred_fallthru
      _
    %189 = shalt.err (0)
    %s191 = sshll.u32 %s181, 4
    %s192 = int_to_ptr.hbm [resolvable:$true] %s191
    %s193 = sshll.u32 %s182, 4
    %s194 = int_to_ptr.vmem [resolvable:$true] %s193
    %196 = dma.hbm_to_vmem [thread:$0]  %s192, 16, %s194, %s183
    %s197 = sadd.s32 %s19, 10
    %s198 = sld [smem:[#allocation5 + %s197]]
    %s199 = scalar_lea.hbm %s1, %s198
    %s200 = scalar_lea.vmem [#allocation2], 10
    %s201 = scalar_lea.sflag [#allocation3], 10
    // Predicated region
    $region42: #{tpu_custom_call.1} parent=1 // pred_check
      _
    $region43: #{tpu_custom_call.1} parent=1 // pred_check_branch
      %203 = sbr.rel target = $region45
    $region44: #{tpu_custom_call.1} parent=1 // pred_region
      %204 = sst [smem:[#allocation12]] [#allocation33]
      %205 = sst [smem:[#allocation13]] [#allocation32]
    $region45: #{tpu_custom_call.1} parent=1 // pred_fallthru
      _
    %207 = shalt.err (0)
    %s209 = sshll.u32 %s199, 4
    %s210 = int_to_ptr.hbm [resolvable:$true] %s209
    %s211 = sshll.u32 %s200, 4
    %s212 = int_to_ptr.vmem [resolvable:$true] %s211
    %214 = dma.hbm_to_vmem [thread:$0]  %s210, 16, %s212, %s201
    %s215 = sadd.s32 %s19, 11
    %s216 = sld [smem:[#allocation5 + %s215]]
    %s217 = scalar_lea.hbm %s1, %s216
    %s218 = scalar_lea.vmem [#allocation2], 11
    %s219 = scalar_lea.sflag [#allocation3], 11
    // Predicated region
    $region46: #{tpu_custom_call.1} parent=1 // pred_check
      _
    $region47: #{tpu_custom_call.1} parent=1 // pred_check_branch
      %221 = sbr.rel target = $region49
    $region48: #{tpu_custom_call.1} parent=1 // pred_region
      %222 = sst [smem:[#allocation12]] [#allocation35]
      %223 = sst [smem:[#allocation13]] [#allocation34]
    $region49: #{tpu_custom_call.1} parent=1 // pred_fallthru
      _
    %225 = shalt.err (0)
    %s227 = sshll.u32 %s217, 4
    %s228 = int_to_ptr.hbm [resolvable:$true] %s227
    %s229 = sshll.u32 %s218, 4
    %s230 = int_to_ptr.vmem [resolvable:$true] %s229
    %232 = dma.hbm_to_vmem [thread:$0]  %s228, 16, %s230, %s219
    %s233 = sadd.s32 %s19, 12
    %s234 = sld [smem:[#allocation5 + %s233]]
    %s235 = scalar_lea.hbm %s1, %s234
    %s236 = scalar_lea.vmem [#allocation2], 12
    %s237 = scalar_lea.sflag [#allocation3], 12
    // Predicated region
    $region50: #{tpu_custom_call.1} parent=1 // pred_check
      _
    $region51: #{tpu_custom_call.1} parent=1 // pred_check_branch
      %239 = sbr.rel target = $region53
    $region52: #{tpu_custom_call.1} parent=1 // pred_region
      %240 = sst [smem:[#allocation12]] [#allocation37]
      %241 = sst [smem:[#allocation13]] [#allocation36]
    $region53: #{tpu_custom_call.1} parent=1 // pred_fallthru
      _
    %243 = shalt.err (0)
    %s245 = sshll.u32 %s235, 4
    %s246 = int_to_ptr.hbm [resolvable:$true] %s245
    %s247 = sshll.u32 %s236, 4
    %s248 = int_to_ptr.vmem [resolvable:$true] %s247
    %250 = dma.hbm_to_vmem [thread:$0]  %s246, 16, %s248, %s237
    %s251 = sadd.s32 %s19, 13
    %s252 = sld [smem:[#allocation5 + %s251]]
    %s253 = scalar_lea.hbm %s1, %s252
    %s254 = scalar_lea.vmem [#allocation2], 13
    %s255 = scalar_lea.sflag [#allocation3], 13
    // Predicated region
    $region54: #{tpu_custom_call.1} parent=1 // pred_check
      _
    $region55: #{tpu_custom_call.1} parent=1 // pred_check_branch
      %257 = sbr.rel target = $region57
    $region56: #{tpu_custom_call.1} parent=1 // pred_region
      %258 = sst [smem:[#allocation12]] [#allocation39]
      %259 = sst [smem:[#allocation13]] [#allocation38]
    $region57: #{tpu_custom_call.1} parent=1 // pred_fallthru
      _
    %261 = shalt.err (0)
    %s263 = sshll.u32 %s253, 4
    %s264 = int_to_ptr.hbm [resolvable:$true] %s263
    %s265 = sshll.u32 %s254, 4
    %s266 = int_to_ptr.vmem [resolvable:$true] %s265
    %268 = dma.hbm_to_vmem [thread:$0]  %s264, 16, %s266, %s255
    %s269 = sadd.s32 %s19, 14
    %s270 = sld [smem:[#allocation5 + %s269]]
    %s271 = scalar_lea.hbm %s1, %s270
    %s272 = scalar_lea.vmem [#allocation2], 14
    %s273 = scalar_lea.sflag [#allocation3], 14
    // Predicated region
    $region58: #{tpu_custom_call.1} parent=1 // pred_check
      _
    $region59: #{tpu_custom_call.1} parent=1 // pred_check_branch
      %275 = sbr.rel target = $region61
    $region60: #{tpu_custom_call.1} parent=1 // pred_region
      %276 = sst [smem:[#allocation12]] [#allocation41]
      %277 = sst [smem:[#allocation13]] [#allocation40]
    $region61: #{tpu_custom_call.1} parent=1 // pred_fallthru
      _
    %279 = shalt.err (0)
    %s281 = sshll.u32 %s271, 4
    %s282 = int_to_ptr.hbm [resolvable:$true] %s281
    %s283 = sshll.u32 %s272, 4
    %s284 = int_to_ptr.vmem [resolvable:$true] %s283
    %286 = dma.hbm_to_vmem [thread:$0]  %s282, 16, %s284, %s273
    %s287 = sadd.s32 %s19, 15
    %s288 = sld [smem:[#allocation5 + %s287]]
    %s289 = scalar_lea.hbm %s1, %s288
    %s290 = scalar_lea.vmem [#allocation2], 15
    %s291 = scalar_lea.sflag [#allocation3], 15
    // Predicated region
    $region62: #{tpu_custom_call.1} parent=1 // pred_check
      _
    $region63: #{tpu_custom_call.1} parent=1 // pred_check_branch
      %293 = sbr.rel target = $region65
    $region64: #{tpu_custom_call.1} parent=1 // pred_region
      %294 = sst [smem:[#allocation12]] [#allocation43]
      %295 = sst [smem:[#allocation13]] [#allocation42]
    $region65: #{tpu_custom_call.1} parent=1 // pred_fallthru
      _
    %297 = shalt.err (0)
    %s299 = sshll.u32 %s289, 4
    %s300 = int_to_ptr.hbm [resolvable:$true] %s299
    %s301 = sshll.u32 %s290, 4
    %s302 = int_to_ptr.vmem [resolvable:$true] %s301
    %304 = dma.hbm_to_vmem [thread:$0]  %s300, 16, %s302, %s291
    %s305 = smul.u32 1, 1
    %s306 = sshll.u32 %s305, 4
    %307 = dma.done [#allocation3], %s306
    %s308 = sshll.u32 %s305, 4
    %309 = dma.done %s39, %s308
    %s310 = sshll.u32 %s305, 4
    %311 = dma.done %s57, %s310
    %s312 = sshll.u32 %s305, 4
    %313 = dma.done %s75, %s312
    %s314 = sshll.u32 %s305, 4
    %315 = dma.done %s93, %s314
    %s316 = sshll.u32 %s305, 4
    %317 = dma.done %s111, %s316
    %s318 = sshll.u32 %s305, 4
    %319 = dma.done %s129, %s318
    %s320 = sshll.u32 %s305, 4
    %321 = dma.done %s147, %s320
    %s322 = sshll.u32 %s305, 4
    %323 = dma.done %s165, %s322
    %s324 = sshll.u32 %s305, 4
    %325 = dma.done %s183, %s324
    %s326 = sshll.u32 %s305, 4
    %327 = dma.done %s201, %s326
    %s328 = sshll.u32 %s305, 4
    %329 = dma.done %s219, %s328
    %s330 = sshll.u32 %s305, 4
    %331 = dma.done %s237, %s330
    %s332 = sshll.u32 %s305, 4
    %333 = dma.done %s255, %s332
    %s334 = sshll.u32 %s305, 4
    %335 = dma.done %s273, %s334
    %s336 = sshll.u32 %s305, 4
    %337 = dma.done %s291, %s336
    %v338 = vld [vmem:[#allocation2] sm:$0xff]
    %v339 = vld [vmem:[#allocation2 + $0x8] sm:$0xff]
    %340 = vst [vmem:[#allocation6] sm:$0xff] %v338
    %341 = vst [vmem:[#allocation6 + $0x8] sm:$0xff] %v339
    %p342 = scmp.eq.s32.totalorder 0, 0
    // Predicated region
    $region66: #{tpu_custom_call.1} parent=1 // pred_check
      %p343 = pneg %p342
    $region67: #{tpu_custom_call.1} parent=1 // pred_check_branch
      %345 = sbr.rel (%p343) target = $region69
    $region68: #{tpu_custom_call.1} parent=1 // pred_region
      %346 = vst [vmem:[#allocation8] sm:$0x3] 0.0
    $region69: #{tpu_custom_call.1} parent=1 // pred_fallthru
      _
    %v349 = vrot.slane %v338, 2
    %v350 = vrot.slane %v338, 4
    %v351 = vrot.slane %v338, 6
    %v352 = vrot.slane %v339, 2
    %v353 = vrot.slane %v339, 4
    %v354 = vrot.slane %v339, 6
    %vm361 = vcmask 1041408
    %v362 = vsel %vm361, %v338, 0.0
    %v363 = vsel %vm361, %v349, 0.0
    %v364 = vadd.f32 %v362, %v363
    %v365 = vsel %vm361, %v350, 0.0
    %v366 = vadd.f32 %v364, %v365
    %v367 = vsel %vm361, %v351, 0.0
    %v368 = vadd.f32 %v366, %v367
    %v369 = vsel %vm361, %v339, 0.0
    %v370 = vadd.f32 %v368, %v369
    %v371 = vsel %vm361, %v352, 0.0
    %v372 = vadd.f32 %v370, %v371
    %v373 = vsel %vm361, %v353, 0.0
    %v374 = vadd.f32 %v372, %v373
    %v375 = vsel %vm361, %v354, 0.0
    %v376 = vadd.f32 %v374, %v375
    %v377 = vld [vmem:[#allocation8] sm:$0x3]
    %v378 = vadd.f32 %v377, %v376
    %379 = vst [vmem:[#allocation8] sm:$0x3] %v378
    // Predicated region
    $region70: #{tpu_custom_call.1} parent=1 // pred_check
      %p380 = pneg %p342
    $region71: #{tpu_custom_call.1} parent=1 // pred_check_branch
      %382 = sbr.rel (%p380) target = $region73
    $region72: #{tpu_custom_call.1} parent=1 // pred_region
      %v383 = vld [vmem:[#allocation8] sm:$0x3]
      %v384 = vmul.f32 %v383, 0.125
      %385 = vst [vmem:[#allocation8] sm:$0x3] %v384
    $region73: #{tpu_custom_call.1} parent=1 // pred_fallthru
      _
    // Predicated region
    $region74: #{tpu_custom_call.1} parent=1 // pred_check
      _
    $region75: #{tpu_custom_call.1} parent=1 // pred_check_branch
      %387 = sbr.rel (0) target = $region77
    $region76: #{tpu_custom_call.1} parent=1 // pred_region
      %389 = vsyncadd [#allocation7], 0
      %s390 = sshll.u32 [#allocation6], 4
      %s391 = int_to_ptr.vmem [resolvable:$true] %s390
      %s392 = sshll.u32 %s2, 4
      %s393 = int_to_ptr.hbm [resolvable:$true] %s392
      %398 = dma.vmem_to_hbm [thread:$0]  %s391, 256, %s393, [#allocation7], 128, 128, 8
    $region77: #{tpu_custom_call.1} parent=1 // pred_fallthru
      _
    // Predicated region
    $region78: #{tpu_custom_call.1} parent=1 // pred_check
      _
    $region79: #{tpu_custom_call.1} parent=1 // pred_check_branch
      %400 = sbr.rel (0) target = $region81
    $region80: #{tpu_custom_call.1} parent=1 // pred_region
      %402 = vsyncadd [#allocation9], 0
      %s404 = sshll.u32 [#allocation8], 4
      %s405 = int_to_ptr.vmem [resolvable:$true] %s404
      %s406 = sshll.u32 %s3, 4
      %s407 = int_to_ptr.hbm [resolvable:$true] %s406
      %409 = dma.vmem_to_hbm [thread:$0]  %s405, 32, %s407, [#allocation9]
    $region81: #{tpu_custom_call.1} parent=1 // pred_fallthru
      _
    // Predicated region
    $region82: #{tpu_custom_call.1} parent=1 // pred_check
      _
    $region83: #{tpu_custom_call.1} parent=1 // pred_check_branch
      %411 = sbr.rel (0) target = $region85
    $region84: #{tpu_custom_call.1} parent=1 // pred_region
      %413 = dma.done [#allocation7], 256
    $region85: #{tpu_custom_call.1} parent=1 // pred_fallthru
      _
    // Predicated region
    $region86: #{tpu_custom_call.1} parent=1 // pred_check
      _
    $region87: #{tpu_custom_call.1} parent=1 // pred_check_branch
      %415 = sbr.rel (0) target = $region89
    $region88: #{tpu_custom_call.1} parent=1 // pred_region
      %417 = dma.done [#allocation9], 32
    $region89: #{tpu_custom_call.1} parent=1 // pred_fallthru
      _
    %418 = vsyncpa [#allocation7], 1
    %419 = vsyncpa [#allocation9], 1
  %420 = vsyncmov [#allocation3]
  %s421 = vpop.sfrf %420
  %p422 = scmp.eq.s32.totalorder %s421, 0
  %p423 = pneg %p422
  %425 = shalt.err (%p423)
  %s426 = scalar_lea.sflag [#allocation3], 1
  %427 = vsyncmov %s426
  %s428 = vpop.sfrf %427
  %p429 = scmp.eq.s32.totalorder %s428, 0
  %p430 = pneg %p429
  %432 = shalt.err (%p430)
  %s433 = scalar_lea.sflag [#allocation3], 2
  %434 = vsyncmov %s433
  %s435 = vpop.sfrf %434
  %p436 = scmp.eq.s32.totalorder %s435, 0
  %p437 = pneg %p436
  %439 = shalt.err (%p437)
  %s440 = scalar_lea.sflag [#allocation3], 3
  %441 = vsyncmov %s440
  %s442 = vpop.sfrf %441
  %p443 = scmp.eq.s32.totalorder %s442, 0
  %p444 = pneg %p443
  %446 = shalt.err (%p444)
  %s447 = scalar_lea.sflag [#allocation3], 4
  %448 = vsyncmov %s447
  %s449 = vpop.sfrf %448
  %p450 = scmp.eq.s32.totalorder %s449, 0
  %p451 = pneg %p450
  %453 = shalt.err (%p451)
  %s454 = scalar_lea.sflag [#allocation3], 5
  %455 = vsyncmov %s454
  %s456 = vpop.sfrf %455
  %p457 = scmp.eq.s32.totalorder %s456, 0
  %p458 = pneg %p457
  %460 = shalt.err (%p458)
  %s461 = scalar_lea.sflag [#allocation3], 6
  %462 = vsyncmov %s461
  %s463 = vpop.sfrf %462
  %p464 = scmp.eq.s32.totalorder %s463, 0
  %p465 = pneg %p464
  %467 = shalt.err (%p465)
  %s468 = scalar_lea.sflag [#allocation3], 7
  %469 = vsyncmov %s468
  %s470 = vpop.sfrf %469
  %p471 = scmp.eq.s32.totalorder %s470, 0
  %p472 = pneg %p471
  %474 = shalt.err (%p472)
  %s475 = scalar_lea.sflag [#allocation3], 8
  %476 = vsyncmov %s475
  %s477 = vpop.sfrf %476
  %p478 = scmp.eq.s32.totalorder %s477, 0
  %p479 = pneg %p478
  %481 = shalt.err (%p479)
  %s482 = scalar_lea.sflag [#allocation3], 9
  %483 = vsyncmov %s482
  %s484 = vpop.sfrf %483
  %p485 = scmp.eq.s32.totalorder %s484, 0
  %p486 = pneg %p485
  %488 = shalt.err (%p486)
  %s489 = scalar_lea.sflag [#allocation3], 10
  %490 = vsyncmov %s489
  %s491 = vpop.sfrf %490
  %p492 = scmp.eq.s32.totalorder %s491, 0
  %p493 = pneg %p492
  %495 = shalt.err (%p493)
  %s496 = scalar_lea.sflag [#allocation3], 11
  %497 = vsyncmov %s496
  %s498 = vpop.sfrf %497
  %p499 = scmp.eq.s32.totalorder %s498, 0
  %p500 = pneg %p499
  %502 = shalt.err (%p500)
  %s503 = scalar_lea.sflag [#allocation3], 12
  %504 = vsyncmov %s503
  %s505 = vpop.sfrf %504
  %p506 = scmp.eq.s32.totalorder %s505, 0
  %p507 = pneg %p506
  %509 = shalt.err (%p507)
  %s510 = scalar_lea.sflag [#allocation3], 13
  %511 = vsyncmov %s510
  %s512 = vpop.sfrf %511
  %p513 = scmp.eq.s32.totalorder %s512, 0
  %p514 = pneg %p513
  %516 = shalt.err (%p514)
  %s517 = scalar_lea.sflag [#allocation3], 14
  %518 = vsyncmov %s517
  %s519 = vpop.sfrf %518
  %p520 = scmp.eq.s32.totalorder %s519, 0
  %p521 = pneg %p520
  %523 = shalt.err (%p521)
  %s524 = scalar_lea.sflag [#allocation3], 15
  %525 = vsyncmov %s524
  %s526 = vpop.sfrf %525
  %p527 = scmp.eq.s32.totalorder %s526, 0
  %p528 = pneg %p527
  %530 = shalt.err (%p528)

</llo_original>
